<compile_context>
chip_gen: v6e
topology: v6e:2x2x1
jax: 0.10.0
libtpu: 0.0.40
codegen_flags: <defaults>
</compile_context>

<pallas_src>
import functools

import jax
import jax.numpy as jnp
import numpy as np
from jax.experimental import pallas as pl
from jax.experimental.pallas import tpu as pltpu


def _round_up(a: int, b: int) -> int:
    return (a + b - 1) // b * b


def _interp_matrix(out_size: int, in_size: int) -> np.ndarray:
    """1-D bilinear interpolation matrix, align_corners=True. Shape (out, in)."""
    if out_size == 1 or in_size == 1:
        src = np.zeros((out_size,), dtype=np.float64)
    else:
        scale = (in_size - 1) / (out_size - 1)
        src = np.arange(out_size, dtype=np.float64) * scale
    i0 = np.clip(np.floor(src).astype(np.int64), 0, in_size - 1)
    i1 = np.clip(i0 + 1, 0, in_size - 1)
    frac = src - i0
    w = np.zeros((out_size, in_size), dtype=np.float64)
    rows = np.arange(out_size)
    w[rows, i0] += 1.0 - frac
    w[rows, i1] += frac
    return w.astype(np.float32)


def _tpu_params():
    """Best-effort (vmem_capacity_bytes, peak bf16 MXU flop/s, HBM bytes/s)."""
    vmem = 64 * 1024 * 1024  # conservative (v7x physical VMEM)
    try:
        vmem = int(pltpu.get_tpu_info().vmem_capacity_bytes)
    except Exception:
        pass
    kind = ""
    try:
        kind = jax.devices()[0].device_kind.lower()
    except Exception:
        pass
    if "v7" in kind:
        peak, bw = 990e12, 3.2e12
    elif "v6" in kind:
        peak, bw = 918e12, 1.3e12
    elif "v5" in kind and ("lite" in kind or "v5e" in kind):
        peak, bw = 197e12, 0.82e12
    else:
        peak, bw = 394e12, 1.0e12  # conservative middle
    return vmem, peak, bw


# ----------------------------- kernels ---------------------------------------


def _kron_kernel(x_ref, w_ref, o_ref):
    # x_ref: (B, Hin*Win); w_ref: (Hin*Win, Nout_pad); o_ref: (B, Nout_pad)
    o_ref[...] = jnp.dot(x_ref[...], w_ref[...],
                         preferred_element_type=jnp.float32).astype(o_ref.dtype)


def _separable_kernel(x_ref, wwt_ref, wh_ref, o_ref, y1_ref, *, h_aligned):
    # x_ref:  (B, Hin, Win)
    # wwt_ref:(Win, Wout_pad)     wh_ref: (TH, Hin)
    # o_ref:  (B, TH, Wout_pad)   y1_ref: (B, Hin, Wout_pad) f32 scratch
    b, h_in, w_in = x_ref.shape
    w_out_pad = wwt_ref.shape[1]

    # Width pass: done once per plane block (scratch persists across the j axis).
    @pl.when(pl.program_id(1) == 0)
    def _width_pass():
        if h_aligned:
            # (B*Hin, Win) collapse is layout-free when Hin is a sublane multiple.
            y1 = jnp.dot(x_ref[...].reshape(b * h_in, w_in), wwt_ref[...],
                         preferred_element_type=jnp.float32)
            y1_ref[...] = y1.reshape(b, h_in, w_out_pad)
        else:
            def wbody(i, carry):
                y1_ref[i] = jnp.dot(x_ref[i], wwt_ref[...],
                                    preferred_element_type=jnp.float32)
                return carry
            jax.lax.fori_loop(0, b, wbody, 0)

    # Height pass: one shared 2-D weight, per-plane 2-D matmuls (no broadcast_to).
    def hbody(i, carry):
        y1 = y1_ref[i].astype(wh_ref.dtype)
        o_ref[i] = jnp.dot(wh_ref[...], y1,
                           preferred_element_type=jnp.float32).astype(o_ref.dtype)
        return carry
    jax.lax.fori_loop(0, b, hbody, 0)


# ---------------------------- tile selection ----------------------------------


def _choose_kron_batch(nc, kin, nout_pad, x_bytes, w_bytes, sublane, budget):
    weight_vmem = 2 * kin * nout_pad * w_bytes                 # double-buffered weight
    per_plane = 2 * (kin + nout_pad) * x_bytes + nout_pad * 4  # dbl-buf in/out + f32 acc
    avail = max(budget - weight_vmem, per_plane)
    if nc <= sublane:
        b = nc                                  # block == full dim (allowed)
    else:
        b = int(min(512, avail // per_plane, _round_up(nc, sublane)))
        b = max(sublane, (b // sublane) * sublane)
    return b, pl.cdiv(nc, b)


def _choose_sep_tiles(nc, h_in, w_in, h_out, w_out_pad, x_bytes, w_bytes,
                      sublane, budget):
    def need(b, th):
        return (2 * b * h_in * w_in * x_bytes                    # input blocks
                + 2 * b * th * w_out_pad * x_bytes                # output blocks
                + 2 * (w_in * w_out_pad + th * h_in) * w_bytes    # weight blocks
                + b * h_in * w_out_pad * 4)                       # f32 intermediate

    th = h_out
    b = 1
    for cand in (256, 128, 64, 32, 16, 8, 4, 2, 1):
        if cand <= nc and need(cand, th) <= budget:
            b = cand
            break

    if need(b, th) > budget and h_out > sublane:
        # One plane at a time, height-tiled output (TH kept a packed-sublane multiple).
        b = 1
        th = sublane
        for cand in (sublane * m for m in (64, 32, 16, 8, 4, 2, 1)):
            if cand < h_out and need(1, cand) <= budget:
                th = cand
                break
    # TODO(synk): planes whose input or width-pass intermediate alone exceeds VMEM
    # would additionally need W / input-row tiling (data-dependent row windows).
    return b, th, pl.cdiv(nc, b), pl.cdiv(h_out, th)


# ------------------------------ entry point -----------------------------------


@functools.partial(jax.jit, static_argnums=(1, 2, 3))
def _upsample_jit(x, fsize, method, compute_in_bf16):
    n, c, h_in, w_in = x.shape
    h_out, w_out = fsize
    nc = n * c
    out_dtype = x.dtype

    vmem_cap, peak_flops, hbm_bw = _tpu_params()
    vmem_budget = vmem_cap // 2                       # block working-set budget
    vmem_limit = min((vmem_cap * 3) // 4, 100 * 1024 * 1024)

    if compute_in_bf16 and x.dtype == jnp.float32:
        x = x.astype(jnp.bfloat16)
    compute_dtype = x.dtype
    # NOTE: for bf16 inputs the interpolation coefficients are also bf16 (MXU
    # operand dtype); this differs from PyTorch's f32 coefficients by ~2^-8 rel.
    w_dtype = jnp.bfloat16 if compute_dtype == jnp.bfloat16 else jnp.float32
    x_bytes = jnp.dtype(compute_dtype).itemsize
    w_bytes = jnp.dtype(w_dtype).itemsize
    sublane = {1: 32, 2: 16, 4: 8}.get(x_bytes, 8)
    eff_flops = peak_flops if w_bytes == 2 else peak_flops / 4.0  # f32 = multi-pass MXU

    wh = _interp_matrix(h_out, h_in)       # (H_out, H_in)
    ww = _interp_matrix(w_out, w_in)       # (W_out, W_in)

    kin = h_in * w_in
    nout = h_out * w_out
    nout_pad = _round_up(nout, 128)        # lane-dense kron output
    w_out_pad = _round_up(w_out, 128)      # lane-dense separable output

    if method is None:
        kron_weight_bytes = kin * nout_pad * w_bytes
        hbm_time = nc * (kin + nout_pad) * x_bytes / hbm_bw
        kron_time = 2.0 * nc * kin * nout_pad / eff_flops
        fits = kron_weight_bytes <= vmem_budget // 4
        # Keep kron only while it stays ~memory-bound on this generation
        # (+2 µs absolute slack so tiny, overhead-dominated problems stay on kron).
        method = "kron" if (fits and kron_time <= 1.5 * hbm_time + 2e-6) else "separable"

    if method == "kron":
        # out[b, o*W_out + p] = sum_{h,w} x[b, h*W_in + w] * Wh[o,h] * Ww[p,w]
        w_np = np.einsum("oh,pw->hwop", wh, ww).reshape(kin, nout)
        if nout_pad != nout:
            w_np = np.pad(w_np, ((0, 0), (0, nout_pad - nout)))
        w_kron_t = jnp.asarray(w_np, dtype=w_dtype)

        b, grid = _choose_kron_batch(nc, kin, nout_pad, x_bytes, w_bytes,
                                     sublane, vmem_budget)
        x2d = x.reshape(nc, kin)           # free row-major view; no jnp.pad round-trip

        cost = pl.CostEstimate(
            flops=2 * nc * kin * nout_pad,
            transcendentals=0,
            bytes_accessed=nc * (kin + nout_pad) * x_bytes + kin * nout_pad * w_bytes)

        out2d = pl.pallas_call(
            _kron_kernel,
            out_shape=jax.ShapeDtypeStruct((nc, nout_pad), out_dtype),
            grid_spec=pltpu.PrefetchScalarGridSpec(
                num_scalar_prefetch=0,
                grid=(grid,),
                in_specs=[
                    pl.BlockSpec((b, kin), lambda i: (i, 0)),
                    pl.BlockSpec((kin, nout_pad), lambda i: (0, 0)),
                ],
                out_specs=pl.BlockSpec((b, nout_pad), lambda i: (i, 0)),
            ),
            compiler_params=pltpu.CompilerParams(
                dimension_semantics=("parallel",),
                vmem_limit_bytes=vmem_limit),
            cost_estimate=cost,
        )(x2d, w_kron_t)

        if nout_pad != nout:
            out2d = out2d[:, :nout]
        return out2d.reshape(n, c, h_out, w_out).astype(out_dtype)

    elif method == "separable":
        wwt_np = ww.T                                       # (W_in, W_out)
        if w_out_pad != w_out:
            wwt_np = np.pad(wwt_np, ((0, 0), (0, w_out_pad - w_out)))
        wwt = jnp.asarray(wwt_np, dtype=w_dtype)            # (W_in, W_out_pad)
        wh_j = jnp.asarray(wh, dtype=w_dtype)               # (H_out, H_in)

        b, th, gi, gj = _choose_sep_tiles(nc, h_in, w_in, h_out, w_out_pad,
                                          x_bytes, w_bytes, sublane, vmem_budget)
        x3d = x.reshape(nc, h_in, w_in)                     # free view, no padding

        cost = pl.CostEstimate(
            flops=2 * nc * (h_in * w_in * w_out_pad + h_out * h_in * w_out_pad),
            transcendentals=0,
            bytes_accessed=(nc * (h_in * w_in + h_out * w_out_pad) * x_bytes
                            + (w_in * w_out_pad + h_out * h_in) * w_bytes))

        kernel = functools.partial(_separable_kernel,
                                   h_aligned=(h_in % sublane == 0))
        out3d = pl.pallas_call(
            kernel,
            out_shape=jax.ShapeDtypeStruct((nc, h_out, w_out_pad), out_dtype),
            grid_spec=pltpu.PrefetchScalarGridSpec(
                num_scalar_prefetch=0,
                grid=(gi, gj),
                in_specs=[
                    pl.BlockSpec((b, h_in, w_in), lambda i, j: (i, 0, 0)),
                    pl.BlockSpec((w_in, w_out_pad), lambda i, j: (0, 0)),
                    pl.BlockSpec((th, h_in), lambda i, j: (j, 0)),
                ],
                out_specs=pl.BlockSpec((b, th, w_out_pad), lambda i, j: (i, j, 0)),
                scratch_shapes=[pltpu.VMEM((b, h_in, w_out_pad), jnp.float32)],
            ),
            compiler_params=pltpu.CompilerParams(
                dimension_semantics=("parallel", "arbitrary"),
                vmem_limit_bytes=vmem_limit),
            cost_estimate=cost,
        )(x3d, wwt, wh_j)

        if w_out_pad != w_out:
            out3d = out3d[:, :, :w_out]
        return out3d.reshape(n, c, h_out, w_out).astype(out_dtype)

    else:
        raise ValueError(f"unknown method: {method!r}")


def upsample_bilinear_align_corners(x, fsize, method=None, compute_in_bf16=False):
    """x: (N, C, H, W); fsize: (H_out, W_out). Bilinear, align_corners=True."""
    return _upsample_jit(x, tuple(int(s) for s in fsize), method, bool(compute_in_bf16))


def _reference(x, fsize):
    """Pure-JAX reference (same separable linear formulation)."""
    h_out, w_out = fsize
    _, _, h_in, w_in = x.shape
    wh = jnp.asarray(_interp_matrix(h_out, h_in))
    ww = jnp.asarray(_interp_matrix(w_out, w_in))
    return jnp.einsum("oh,nchw,pw->ncop", wh, x.astype(jnp.float32), ww).astype(x.dtype)


if __name__ == "__main__":
    key = jax.random.PRNGKey(0)
    x = jax.random.normal(key, (2, 4, 16, 16), dtype=jnp.float32)
    fsize = (32, 24)

    ref = _reference(x, fsize)

    # Default (generation-aware heuristic) path.
    out = upsample_bilinear_align_corners(x, fsize)
    out = jax.block_until_ready(out)
    assert out.shape == (2, 4, 32, 24), out.shape
    assert jnp.allclose(out, ref, atol=1e-4, rtol=1e-4), float(jnp.max(jnp.abs(out - ref)))

    # Explicit Kronecker (lane-dense single-matmul) path.
    out_k = upsample_bilinear_align_corners(x, fsize, method="kron")
    out_k = jax.block_until_ready(out_k)
    assert jnp.allclose(out_k, ref, atol=1e-4, rtol=1e-4), float(jnp.max(jnp.abs(out_k - ref)))

    # Explicit separable (large-spatial) path for coverage.
    out_s = upsample_bilinear_align_corners(x, fsize, method="separable")
    out_s = jax.block_until_ready(out_s)
    assert jnp.allclose(out_s, ref, atol=1e-4, rtol=1e-4), float(jnp.max(jnp.abs(out_s - ref)))

    print("KERNEL_OK")
</pallas_src>

<mosaic_0001>
module attributes {stable_mosaic.version = 11 : i64} {
  func.func @_kron_kernel(%arg0: i32, %arg1: memref<8x256xf32, #tpu.memory_space<vmem>>, %arg2: memref<256x768xf32, #tpu.memory_space<vmem>>, %arg3: memref<8x768xf32, #tpu.memory_space<vmem>>) attributes {dimension_semantics = [#tpu.dimension_semantics<parallel>], iteration_bounds = array<i64: 1>, scalar_prefetch = 0 : i64, scratch_operands = 0 : i64, tpu.core_type = #tpu.core_type<tc>, window_params = [{transform_indices = @transform_0, window_bounds = array<i64: 8, 256>}, {pipeline_mode = #tpu.pipeline_mode<synchronous>, transform_indices = @transform_1, window_bounds = array<i64: 256, 768>}, {transform_indices = @transform_2, window_bounds = array<i64: 8, 768>}]} {
    %c0 = arith.constant 0 : index
    %c0_0 = arith.constant 0 : index
    %0 = vector.load %arg1[%c0, %c0_0] : memref<8x256xf32, #tpu.memory_space<vmem>>, vector<8x256xf32>
    %c0_1 = arith.constant 0 : index
    %c0_2 = arith.constant 0 : index
    %1 = vector.load %arg2[%c0_1, %c0_2] : memref<256x768xf32, #tpu.memory_space<vmem>>, vector<256x768xf32>
    %cst = arith.constant dense<0.000000e+00> : vector<8x768xf32>
    %2 = tpu.matmul %0, %1, %cst {dimension_numbers = #tpu.dot_dimension_numbers<[1], [0], [0], [1], [0, 0, 1, 1], [], []>} : vector<8x256xf32>, vector<256x768xf32>, vector<8x768xf32> -> vector<8x768xf32>
    %c0_3 = arith.constant 0 : index
    %c0_4 = arith.constant 0 : index
    %3 = vector.load %arg3[%c0_3, %c0_4] : memref<8x768xf32, #tpu.memory_space<vmem>>, vector<8x768xf32>
    tpu.vector_store %arg3[%c0_3, %c0_4], %2 {strides = array<i32>} : memref<8x768xf32, #tpu.memory_space<vmem>>, vector<8x768xf32>,
    return
  }
  func.func @transform_0(%arg0: i32) -> (i32, i32) {
    %c0_i32 = arith.constant 0 : i32
    %c0_i32_0 = arith.constant 0 : i32
    return %arg0, %c0_i32 : i32, i32
  }
  func.func @transform_1(%arg0: i32) -> (i32, i32) {
    %c0_i32 = arith.constant 0 : i32
    %c0_i32_0 = arith.constant 0 : i32
    %c0_i32_1 = arith.constant 0 : i32
    return %c0_i32, %c0_i32_0 : i32, i32
  }
  func.func @transform_2(%arg0: i32) -> (i32, i32) {
    %c0_i32 = arith.constant 0 : i32
    %c0_i32_0 = arith.constant 0 : i32
    return %arg0, %c0_i32 : i32, i32
  }
}

</mosaic_0001>

<llo_original>
// kernel: _upsample_jit.1
$region0: #{_upsample_jit.1}
  #allocation0 [shape = 'u32[]', space=smem, size = 0x4, offset = 0x4, fixed_abs, tag = 'smem constant byte address 0x4 - core index']
  #allocation1 [shape = 'u32[144,128]{1,0:T(1,128)}', space=vmem, size = 0x12000, scoped, tag = 'internal scratch']
  %s0 = inlined_call_operand.vmem [shape: f32[8,256], index: 0, kind: input, shape index: {}]
  %s1 = inlined_call_operand.hbm [shape: f32[256,768], index: 1, kind: input, shape index: {}]
  %s2 = inlined_call_operand.vmem [shape: f32[8,768], index: 2, kind: output, shape index: {}]
  %s3 = sld [smem:[#allocation0]]
  $region22: #{_upsample_jit.1} parent=0
    _
  %s5 = ssub.s32 1, %s3
  %s6 = scalar_select 0, %s5, %s3
  $region1: #{_upsample_jit.1} parent=0
    #allocation2 [shape = 'u8[786432]{0}', space=vmem, size = 0xc0000, scoped, tag = 'input window, operand 1, single buffered']
    #allocation3 [shape = 's32[1]{0}', space=sflag, size = 0x4, scoped, tag = 'scoped memory for _upsample_jit.1']
    %7 = vsyncpa [#allocation3], 0
    // Predicated region
    $region2: #{_upsample_jit.1} parent=1 // pred_check
      _
    $region3: #{_upsample_jit.1} parent=1 // pred_check_branch
      %9 = sbr.rel (0) target = $region5
    $region4: #{_upsample_jit.1} parent=1 // pred_region
      _
    $region5: #{_upsample_jit.1} parent=1 // pred_fallthru
      _
    // Predicated region
    $region6: #{_upsample_jit.1} parent=1 // pred_check
      _
    $region7: #{_upsample_jit.1} parent=1 // pred_check_branch
      %11 = sbr.rel (0) target = $region9
    $region8: #{_upsample_jit.1} parent=1 // pred_region
      %s13 = ssub.s32 24576, 24576
      %14 = vsyncadd [#allocation3], %s13
      %s15 = sshll.u32 [#allocation2], 4
      %s16 = int_to_ptr.vmem [resolvable:$true] %s15
      %21 = dma.hbm_to_vmem [thread:$0]  %s1, 24576, %s16, [#allocation3], 768, 768, 48
    $region9: #{_upsample_jit.1} parent=1 // pred_fallthru
      _
    // Predicated region
    $region10: #{_upsample_jit.1} parent=1 // pred_check
      _
    $region11: #{_upsample_jit.1} parent=1 // pred_check_branch
      %23 = sbr.rel (0) target = $region13
    $region12: #{_upsample_jit.1} parent=1 // pred_region
      %24 = dma.done [#allocation3], 24576
    $region13: #{_upsample_jit.1} parent=1 // pred_fallthru
      _
    %v25 = vld [vmem:[%s0] sm:$0xff]
    %v26 = vld [vmem:[%s0 + $0x8] sm:$0xff]
    %v27 = vld [vmem:[#allocation2] sm:$0xff]
    %v28 = vld [vmem:[#allocation2 + $0x8] sm:$0xff]
    %v29 = vld [vmem:[#allocation2 + $0x10] sm:$0xff]
    %v30 = vld [vmem:[#allocation2 + $0x18] sm:$0xff]
    %v31 = vld [vmem:[#allocation2 + $0x20] sm:$0xff]
    %v32 = vld [vmem:[#allocation2 + $0x28] sm:$0xff]
    %v33 = vld [vmem:[#allocation2 + $0x30] sm:$0xff]
    %v34 = vld [vmem:[#allocation2 + $0x38] sm:$0xff]
    %v35 = vld [vmem:[#allocation2 + $0x40] sm:$0xff]
    %v36 = vld [vmem:[#allocation2 + $0x48] sm:$0xff]
    %v37 = vld [vmem:[#allocation2 + $0x50] sm:$0xff]
    %v38 = vld [vmem:[#allocation2 + $0x58] sm:$0xff]
    %v39 = vld [vmem:[#allocation2 + $0x60] sm:$0xff]
    %v40 = vld [vmem:[#allocation2 + $0x68] sm:$0xff]
    %v41 = vld [vmem:[#allocation2 + $0x70] sm:$0xff]
    %v42 = vld [vmem:[#allocation2 + $0x78] sm:$0xff]
    %v43 = vld [vmem:[#allocation2 + $0x80] sm:$0xff]
    %v44 = vld [vmem:[#allocation2 + $0x88] sm:$0xff]
    %v45 = vld [vmem:[#allocation2 + $0x90] sm:$0xff]
    %v46 = vld [vmem:[#allocation2 + $0x98] sm:$0xff]
    %v47 = vld [vmem:[#allocation2 + $0xa0] sm:$0xff]
    %v48 = vld [vmem:[#allocation2 + $0xa8] sm:$0xff]
    %v49 = vld [vmem:[#allocation2 + $0xb0] sm:$0xff]
    %v50 = vld [vmem:[#allocation2 + $0xb8] sm:$0xff]
    %v51 = vld [vmem:[#allocation2 + $0xc0] sm:$0xff]
    %v52 = vld [vmem:[#allocation2 + $0xc8] sm:$0xff]
    %v53 = vld [vmem:[#allocation2 + $0xd0] sm:$0xff]
    %v54 = vld [vmem:[#allocation2 + $0xd8] sm:$0xff]
    %v55 = vld [vmem:[#allocation2 + $0xe0] sm:$0xff]
    %v56 = vld [vmem:[#allocation2 + $0xe8] sm:$0xff]
    %v57 = vld [vmem:[#allocation2 + $0xf0] sm:$0xff]
    %v58 = vld [vmem:[#allocation2 + $0xf8] sm:$0xff]
    %v59 = vld [vmem:[#allocation2 + $0x100] sm:$0xff]
    %v60 = vld [vmem:[#allocation2 + $0x108] sm:$0xff]
    %v61 = vld [vmem:[#allocation2 + $0x110] sm:$0xff]
    %v62 = vld [vmem:[#allocation2 + $0x118] sm:$0xff]
    %v63 = vld [vmem:[#allocation2 + $0x120] sm:$0xff]
    %v64 = vld [vmem:[#allocation2 + $0x128] sm:$0xff]
    %v65 = vld [vmem:[#allocation2 + $0x130] sm:$0xff]
    %v66 = vld [vmem:[#allocation2 + $0x138] sm:$0xff]
    %v67 = vld [vmem:[#allocation2 + $0x140] sm:$0xff]
    %v68 = vld [vmem:[#allocation2 + $0x148] sm:$0xff]
    %v69 = vld [vmem:[#allocation2 + $0x150] sm:$0xff]
    %v70 = vld [vmem:[#allocation2 + $0x158] sm:$0xff]
    %v71 = vld [vmem:[#allocation2 + $0x160] sm:$0xff]
    %v72 = vld [vmem:[#allocation2 + $0x168] sm:$0xff]
    %v73 = vld [vmem:[#allocation2 + $0x170] sm:$0xff]
    %v74 = vld [vmem:[#allocation2 + $0x178] sm:$0xff]
    %v75 = vld [vmem:[#allocation2 + $0x180] sm:$0xff]
    %v76 = vld [vmem:[#allocation2 + $0x188] sm:$0xff]
    %v77 = vld [vmem:[#allocation2 + $0x190] sm:$0xff]
    %v78 = vld [vmem:[#allocation2 + $0x198] sm:$0xff]
    %v79 = vld [vmem:[#allocation2 + $0x1a0] sm:$0xff]
    %v80 = vld [vmem:[#allocation2 + $0x1a8] sm:$0xff]
    %v81 = vld [vmem:[#allocation2 + $0x1b0] sm:$0xff]
    %v82 = vld [vmem:[#allocation2 + $0x1b8] sm:$0xff]
    %v83 = vld [vmem:[#allocation2 + $0x1c0] sm:$0xff]
    %v84 = vld [vmem:[#allocation2 + $0x1c8] sm:$0xff]
    %v85 = vld [vmem:[#allocation2 + $0x1d0] sm:$0xff]
    %v86 = vld [vmem:[#allocation2 + $0x1d8] sm:$0xff]
    %v87 = vld [vmem:[#allocation2 + $0x1e0] sm:$0xff]
    %v88 = vld [vmem:[#allocation2 + $0x1e8] sm:$0xff]
    %v89 = vld [vmem:[#allocation2 + $0x1f0] sm:$0xff]
    %v90 = vld [vmem:[#allocation2 + $0x1f8] sm:$0xff]
    %v91 = vld [vmem:[#allocation2 + $0x200] sm:$0xff]
    %v92 = vld [vmem:[#allocation2 + $0x208] sm:$0xff]
    %v93 = vld [vmem:[#allocation2 + $0x210] sm:$0xff]
    %v94 = vld [vmem:[#allocation2 + $0x218] sm:$0xff]
    %v95 = vld [vmem:[#allocation2 + $0x220] sm:$0xff]
    %v96 = vld [vmem:[#allocation2 + $0x228] sm:$0xff]
    %v97 = vld [vmem:[#allocation2 + $0x230] sm:$0xff]
    %v98 = vld [vmem:[#allocation2 + $0x238] sm:$0xff]
    %v99 = vld [vmem:[#allocation2 + $0x240] sm:$0xff]
    %v100 = vld [vmem:[#allocation2 + $0x248] sm:$0xff]
    %v101 = vld [vmem:[#allocation2 + $0x250] sm:$0xff]
    %v102 = vld [vmem:[#allocation2 + $0x258] sm:$0xff]
    %v103 = vld [vmem:[#allocation2 + $0x260] sm:$0xff]
    %v104 = vld [vmem:[#allocation2 + $0x268] sm:$0xff]
    %v105 = vld [vmem:[#allocation2 + $0x270] sm:$0xff]
    %v106 = vld [vmem:[#allocation2 + $0x278] sm:$0xff]
    %v107 = vld [vmem:[#allocation2 + $0x280] sm:$0xff]
    %v108 = vld [vmem:[#allocation2 + $0x288] sm:$0xff]
    %v109 = vld [vmem:[#allocation2 + $0x290] sm:$0xff]
    %v110 = vld [vmem:[#allocation2 + $0x298] sm:$0xff]
    %v111 = vld [vmem:[#allocation2 + $0x2a0] sm:$0xff]
    %v112 = vld [vmem:[#allocation2 + $0x2a8] sm:$0xff]
    %v113 = vld [vmem:[#allocation2 + $0x2b0] sm:$0xff]
    %v114 = vld [vmem:[#allocation2 + $0x2b8] sm:$0xff]
    %v115 = vld [vmem:[#allocation2 + $0x2c0] sm:$0xff]
    %v116 = vld [vmem:[#allocation2 + $0x2c8] sm:$0xff]
    %v117 = vld [vmem:[#allocation2 + $0x2d0] sm:$0xff]
    %v118 = vld [vmem:[#allocation2 + $0x2d8] sm:$0xff]
    %v119 = vld [vmem:[#allocation2 + $0x2e0] sm:$0xff]
    %v120 = vld [vmem:[#allocation2 + $0x2e8] sm:$0xff]
    %v121 = vld [vmem:[#allocation2 + $0x2f0] sm:$0xff]
    %v122 = vld [vmem:[#allocation2 + $0x2f8] sm:$0xff]
    %v123 = vld [vmem:[#allocation2 + $0x300] sm:$0xff]
    %v124 = vld [vmem:[#allocation2 + $0x308] sm:$0xff]
    %v125 = vld [vmem:[#allocation2 + $0x310] sm:$0xff]
    %v126 = vld [vmem:[#allocation2 + $0x318] sm:$0xff]
    %v127 = vld [vmem:[#allocation2 + $0x320] sm:$0xff]
    %v128 = vld [vmem:[#allocation2 + $0x328] sm:$0xff]
    %v129 = vld [vmem:[#allocation2 + $0x330] sm:$0xff]
    %v130 = vld [vmem:[#allocation2 + $0x338] sm:$0xff]
    %v131 = vld [vmem:[#allocation2 + $0x340] sm:$0xff]
    %v132 = vld [vmem:[#allocation2 + $0x348] sm:$0xff]
    %v133 = vld [vmem:[#allocation2 + $0x350] sm:$0xff]
    %v134 = vld [vmem:[#allocation2 + $0x358] sm:$0xff]
    %v135 = vld [vmem:[#allocation2 + $0x360] sm:$0xff]
    %v136 = vld [vmem:[#allocation2 + $0x368] sm:$0xff]
    %v137 = vld [vmem:[#allocation2 + $0x370] sm:$0xff]
    %v138 = vld [vmem:[#allocation2 + $0x378] sm:$0xff]
    %v139 = vld [vmem:[#allocation2 + $0x380] sm:$0xff]
    %v140 = vld [vmem:[#allocation2 + $0x388] sm:$0xff]
    %v141 = vld [vmem:[#allocation2 + $0x390] sm:$0xff]
    %v142 = vld [vmem:[#allocation2 + $0x398] sm:$0xff]
    %v143 = vld [vmem:[#allocation2 + $0x3a0] sm:$0xff]
    %v144 = vld [vmem:[#allocation2 + $0x3a8] sm:$0xff]
    %v145 = vld [vmem:[#allocation2 + $0x3b0] sm:$0xff]
    %v146 = vld [vmem:[#allocation2 + $0x3b8] sm:$0xff]
    %v147 = vld [vmem:[#allocation2 + $0x3c0] sm:$0xff]
    %v148 = vld [vmem:[#allocation2 + $0x3c8] sm:$0xff]
    %v149 = vld [vmem:[#allocation2 + $0x3d0] sm:$0xff]
    %v150 = vld [vmem:[#allocation2 + $0x3d8] sm:$0xff]
    %v151 = vld [vmem:[#allocation2 + $0x3e0] sm:$0xff]
    %v152 = vld [vmem:[#allocation2 + $0x3e8] sm:$0xff]
    %v153 = vld [vmem:[#allocation2 + $0x3f0] sm:$0xff]
    %v154 = vld [vmem:[#allocation2 + $0x3f8] sm:$0xff]
    %v155 = vld [vmem:[#allocation2 + $0x400] sm:$0xff]
    %v156 = vld [vmem:[#allocation2 + $0x408] sm:$0xff]
    %v157 = vld [vmem:[#allocation2 + $0x410] sm:$0xff]
    %v158 = vld [vmem:[#allocation2 + $0x418] sm:$0xff]
    %v159 = vld [vmem:[#allocation2 + $0x420] sm:$0xff]
    %v160 = vld [vmem:[#allocation2 + $0x428] sm:$0xff]
    %v161 = vld [vmem:[#allocation2 + $0x430] sm:$0xff]
    %v162 = vld [vmem:[#allocation2 + $0x438] sm:$0xff]
    %v163 = vld [vmem:[#allocation2 + $0x440] sm:$0xff]
    %v164 = vld [vmem:[#allocation2 + $0x448] sm:$0xff]
    %v165 = vld [vmem:[#allocation2 + $0x450] sm:$0xff]
    %v166 = vld [vmem:[#allocation2 + $0x458] sm:$0xff]
    %v167 = vld [vmem:[#allocation2 + $0x460] sm:$0xff]
    %v168 = vld [vmem:[#allocation2 + $0x468] sm:$0xff]
    %v169 = vld [vmem:[#allocation2 + $0x470] sm:$0xff]
    %v170 = vld [vmem:[#allocation2 + $0x478] sm:$0xff]
    %v171 = vld [vmem:[#allocation2 + $0x480] sm:$0xff]
    %v172 = vld [vmem:[#allocation2 + $0x488] sm:$0xff]
    %v173 = vld [vmem:[#allocation2 + $0x490] sm:$0xff]
    %v174 = vld [vmem:[#allocation2 + $0x498] sm:$0xff]
    %v175 = vld [vmem:[#allocation2 + $0x4a0] sm:$0xff]
    %v176 = vld [vmem:[#allocation2 + $0x4a8] sm:$0xff]
    %v177 = vld [vmem:[#allocation2 + $0x4b0] sm:$0xff]
    %v178 = vld [vmem:[#allocation2 + $0x4b8] sm:$0xff]
    %v179 = vld [vmem:[#allocation2 + $0x4c0] sm:$0xff]
    %v180 = vld [vmem:[#allocation2 + $0x4c8] sm:$0xff]
    %v181 = vld [vmem:[#allocation2 + $0x4d0] sm:$0xff]
    %v182 = vld [vmem:[#allocation2 + $0x4d8] sm:$0xff]
    %v183 = vld [vmem:[#allocation2 + $0x4e0] sm:$0xff]
    %v184 = vld [vmem:[#allocation2 + $0x4e8] sm:$0xff]
    %v185 = vld [vmem:[#allocation2 + $0x4f0] sm:$0xff]
    %v186 = vld [vmem:[#allocation2 + $0x4f8] sm:$0xff]
    %v187 = vld [vmem:[#allocation2 + $0x500] sm:$0xff]
    %v188 = vld [vmem:[#allocation2 + $0x508] sm:$0xff]
    %v189 = vld [vmem:[#allocation2 + $0x510] sm:$0xff]
    %v190 = vld [vmem:[#allocation2 + $0x518] sm:$0xff]
    %v191 = vld [vmem:[#allocation2 + $0x520] sm:$0xff]
    %v192 = vld [vmem:[#allocation2 + $0x528] sm:$0xff]
    %v193 = vld [vmem:[#allocation2 + $0x530] sm:$0xff]
    %v194 = vld [vmem:[#allocation2 + $0x538] sm:$0xff]
    %v195 = vld [vmem:[#allocation2 + $0x540] sm:$0xff]
    %v196 = vld [vmem:[#allocation2 + $0x548] sm:$0xff]
    %v197 = vld [vmem:[#allocation2 + $0x550] sm:$0xff]
    %v198 = vld [vmem:[#allocation2 + $0x558] sm:$0xff]
    %v199 = vld [vmem:[#allocation2 + $0x560] sm:$0xff]
    %v200 = vld [vmem:[#allocation2 + $0x568] sm:$0xff]
    %v201 = vld [vmem:[#allocation2 + $0x570] sm:$0xff]
    %v202 = vld [vmem:[#allocation2 + $0x578] sm:$0xff]
    %v203 = vld [vmem:[#allocation2 + $0x580] sm:$0xff]
    %v204 = vld [vmem:[#allocation2 + $0x588] sm:$0xff]
    %v205 = vld [vmem:[#allocation2 + $0x590] sm:$0xff]
    %v206 = vld [vmem:[#allocation2 + $0x598] sm:$0xff]
    %v207 = vld [vmem:[#allocation2 + $0x5a0] sm:$0xff]
    %v208 = vld [vmem:[#allocation2 + $0x5a8] sm:$0xff]
    %v209 = vld [vmem:[#allocation2 + $0x5b0] sm:$0xff]
    %v210 = vld [vmem:[#allocation2 + $0x5b8] sm:$0xff]
    %v211 = vld [vmem:[#allocation2 + $0x5c0] sm:$0xff]
    %v212 = vld [vmem:[#allocation2 + $0x5c8] sm:$0xff]
    %v213 = vld [vmem:[#allocation2 + $0x5d0] sm:$0xff]
    %v214 = vld [vmem:[#allocation2 + $0x5d8] sm:$0xff]
    %v215 = vld [vmem:[#allocation2 + $0x5e0] sm:$0xff]
    %v216 = vld [vmem:[#allocation2 + $0x5e8] sm:$0xff]
    %v217 = vld [vmem:[#allocation2 + $0x5f0] sm:$0xff]
    %v218 = vld [vmem:[#allocation2 + $0x5f8] sm:$0xff]
    %219 = vmatprep.subr.mxu0 %v118
    %220 = vmatpush1.msra.mxu0 %v117
    %221 = vmatprep.subr.mxu0 %v112
    %222 = vmatpush1.msra.mxu0 %v111
    %223 = vmatprep.subr.mxu0 %v106
    %224 = vmatpush1.msra.mxu0 %v105
    %225 = vmatprep.subr.mxu0 %v100
    %226 = vmatpush1.msra.mxu0 %v99
    %227 = vmatprep.subr.mxu0 %v94
    %228 = vmatpush1.msra.mxu0 %v93
    %229 = vmatprep.subr.mxu0 %v88
    %230 = vmatpush1.msra.mxu0 %v87
    %231 = vmatprep.subr.mxu0 %v82
    %232 = vmatpush1.msra.mxu0 %v81
    %233 = vmatprep.subr.mxu0 %v76
    %234 = vmatpush1.msra.mxu0 %v75
    %235 = vmatprep.subr.mxu0 %v70
    %236 = vmatpush1.msra.mxu0 %v69
    %237 = vmatprep.subr.mxu0 %v64
    %238 = vmatpush1.msra.mxu0 %v63
    %239 = vmatprep.subr.mxu0 %v58
    %240 = vmatpush1.msra.mxu0 %v57
    %241 = vmatprep.subr.mxu0 %v52
    %242 = vmatpush1.msra.mxu0 %v51
    %243 = vmatprep.subr.mxu0 %v46
    %244 = vmatpush1.msra.mxu0 %v45
    %245 = vmatprep.subr.mxu0 %v40
    %246 = vmatpush1.msra.mxu0 %v39
    %247 = vmatprep.subr.mxu0 %v34
    %248 = vmatpush1.msra.mxu0 %v33
    %249 = vmatprep.subr.mxu0 %v28
    %250 = vmatpush1.msra.mxu0 %v27
    %251 = vmatprep.subr.mxu0 %v214
    %252 = vmatpush2.msra.mxu0 %v213
    %253 = vmatprep.subr.mxu0 %v208
    %254 = vmatpush2.msra.mxu0 %v207
    %255 = vmatprep.subr.mxu0 %v202
    %256 = vmatpush2.msra.mxu0 %v201
    %257 = vmatprep.subr.mxu0 %v196
    %258 = vmatpush2.msra.mxu0 %v195
    %259 = vmatprep.subr.mxu0 %v190
    %260 = vmatpush2.msra.mxu0 %v189
    %261 = vmatprep.subr.mxu0 %v184
    %262 = vmatpush2.msra.mxu0 %v183
    %263 = vmatprep.subr.mxu0 %v178
    %264 = vmatpush2.msra.mxu0 %v177
    %265 = vmatprep.subr.mxu0 %v172
    %266 = vmatpush2.msra.mxu0 %v171
    %267 = vmatprep.subr.mxu0 %v166
    %268 = vmatpush2.msra.mxu0 %v165
    %269 = vmatprep.subr.mxu0 %v160
    %270 = vmatpush2.msra.mxu0 %v159
    %271 = vmatprep.subr.mxu0 %v154
    %272 = vmatpush2.msra.mxu0 %v153
    %273 = vmatprep.subr.mxu0 %v148
    %274 = vmatpush2.msra.mxu0 %v147
    %275 = vmatprep.subr.mxu0 %v142
    %276 = vmatpush2.msra.mxu0 %v141
    %277 = vmatprep.subr.mxu0 %v136
    %278 = vmatpush2.msra.mxu0 %v135
    %279 = vmatprep.subr.mxu0 %v130
    %280 = vmatpush2.msra.mxu0 %v129
    %281 = vmatprep.subr.mxu0 %v124
    %282 = vmatpush2.msra.mxu0 %v123
    %283 = vmatprep.mubr.f32.mxu0 %v26
    %284 = vmatmul.mubr.f32.gmra.mxu0 %v25
    %v285 = vpop.f32.mrf.mxu0
    %v286 = vadd.f32 0.0, %v285
    %v287 = vpop.f32.mrf.mxu0
    %v288 = vadd.f32 0.0, %v287
    %289 = vdwg.mxu0
    %290 = vmatprep.subr.mxu0 %v120
    %291 = vmatpush1.msra.mxu0 %v119
    %292 = vmatprep.subr.mxu0 %v114
    %293 = vmatpush1.msra.mxu0 %v113
    %294 = vmatprep.subr.mxu0 %v108
    %295 = vmatpush1.msra.mxu0 %v107
    %296 = vmatprep.subr.mxu0 %v102
    %297 = vmatpush1.msra.mxu0 %v101
    %298 = vmatprep.subr.mxu0 %v96
    %299 = vmatpush1.msra.mxu0 %v95
    %300 = vmatprep.subr.mxu0 %v90
    %301 = vmatpush1.msra.mxu0 %v89
    %302 = vmatprep.subr.mxu0 %v84
    %303 = vmatpush1.msra.mxu0 %v83
    %304 = vmatprep.subr.mxu0 %v78
    %305 = vmatpush1.msra.mxu0 %v77
    %306 = vmatprep.subr.mxu0 %v72
    %307 = vmatpush1.msra.mxu0 %v71
    %308 = vmatprep.subr.mxu0 %v66
    %309 = vmatpush1.msra.mxu0 %v65
    %310 = vmatprep.subr.mxu0 %v60
    %311 = vmatpush1.msra.mxu0 %v59
    %312 = vmatprep.subr.mxu0 %v54
    %313 = vmatpush1.msra.mxu0 %v53
    %314 = vmatprep.subr.mxu0 %v48
    %315 = vmatpush1.msra.mxu0 %v47
    %316 = vmatprep.subr.mxu0 %v42
    %317 = vmatpush1.msra.mxu0 %v41
    %318 = vmatprep.subr.mxu0 %v36
    %319 = vmatpush1.msra.mxu0 %v35
    %320 = vmatprep.subr.mxu0 %v30
    %321 = vmatpush1.msra.mxu0 %v29
    %322 = vmatprep.subr.mxu0 %v216
    %323 = vmatpush2.msra.mxu0 %v215
    %324 = vmatprep.subr.mxu0 %v210
    %325 = vmatpush2.msra.mxu0 %v209
    %326 = vmatprep.subr.mxu0 %v204
    %327 = vmatpush2.msra.mxu0 %v203
    %328 = vmatprep.subr.mxu0 %v198
    %329 = vmatpush2.msra.mxu0 %v197
    %330 = vmatprep.subr.mxu0 %v192
    %331 = vmatpush2.msra.mxu0 %v191
    %332 = vmatprep.subr.mxu0 %v186
    %333 = vmatpush2.msra.mxu0 %v185
    %334 = vmatprep.subr.mxu0 %v180
    %335 = vmatpush2.msra.mxu0 %v179
    %336 = vmatprep.subr.mxu0 %v174
    %337 = vmatpush2.msra.mxu0 %v173
    %338 = vmatprep.subr.mxu0 %v168
    %339 = vmatpush2.msra.mxu0 %v167
    %340 = vmatprep.subr.mxu0 %v162
    %341 = vmatpush2.msra.mxu0 %v161
    %342 = vmatprep.subr.mxu0 %v156
    %343 = vmatpush2.msra.mxu0 %v155
    %344 = vmatprep.subr.mxu0 %v150
    %345 = vmatpush2.msra.mxu0 %v149
    %346 = vmatprep.subr.mxu0 %v144
    %347 = vmatpush2.msra.mxu0 %v143
    %348 = vmatprep.subr.mxu0 %v138
    %349 = vmatpush2.msra.mxu0 %v137
    %350 = vmatprep.subr.mxu0 %v132
    %351 = vmatpush2.msra.mxu0 %v131
    %352 = vmatprep.subr.mxu0 %v126
    %353 = vmatpush2.msra.mxu0 %v125
    %354 = vmatprep.mubr.f32.mxu0 %v26
    %355 = vmatmul.mubr.f32.gmra.mxu0 %v25
    %v356 = vpop.f32.mrf.mxu0
    %v357 = vadd.f32 0.0, %v356
    %v358 = vpop.f32.mrf.mxu0
    %v359 = vadd.f32 0.0, %v358
    %360 = vdwg.mxu0
    %361 = vmatprep.subr.mxu0 %v122
    %362 = vmatpush1.msra.mxu0 %v121
    %363 = vmatprep.subr.mxu0 %v116
    %364 = vmatpush1.msra.mxu0 %v115
    %365 = vmatprep.subr.mxu0 %v110
    %366 = vmatpush1.msra.mxu0 %v109
    %367 = vmatprep.subr.mxu0 %v104
    %368 = vmatpush1.msra.mxu0 %v103
    %369 = vmatprep.subr.mxu0 %v98
    %370 = vmatpush1.msra.mxu0 %v97
    %371 = vmatprep.subr.mxu0 %v92
    %372 = vmatpush1.msra.mxu0 %v91
    %373 = vmatprep.subr.mxu0 %v86
    %374 = vmatpush1.msra.mxu0 %v85
    %375 = vmatprep.subr.mxu0 %v80
    %376 = vmatpush1.msra.mxu0 %v79
    %377 = vmatprep.subr.mxu0 %v74
    %378 = vmatpush1.msra.mxu0 %v73
    %379 = vmatprep.subr.mxu0 %v68
    %380 = vmatpush1.msra.mxu0 %v67
    %381 = vmatprep.subr.mxu0 %v62
    %382 = vmatpush1.msra.mxu0 %v61
    %383 = vmatprep.subr.mxu0 %v56
    %384 = vmatpush1.msra.mxu0 %v55
    %385 = vmatprep.subr.mxu0 %v50
    %386 = vmatpush1.msra.mxu0 %v49
    %387 = vmatprep.subr.mxu0 %v44
    %388 = vmatpush1.msra.mxu0 %v43
    %389 = vmatprep.subr.mxu0 %v38
    %390 = vmatpush1.msra.mxu0 %v37
    %391 = vmatprep.subr.mxu0 %v32
    %392 = vmatpush1.msra.mxu0 %v31
    %393 = vmatprep.subr.mxu0 %v218
    %394 = vmatpush2.msra.mxu0 %v217
    %395 = vmatprep.subr.mxu0 %v212
    %396 = vmatpush2.msra.mxu0 %v211
    %397 = vmatprep.subr.mxu0 %v206
    %398 = vmatpush2.msra.mxu0 %v205
    %399 = vmatprep.subr.mxu0 %v200
    %400 = vmatpush2.msra.mxu0 %v199
    %401 = vmatprep.subr.mxu0 %v194
    %402 = vmatpush2.msra.mxu0 %v193
    %403 = vmatprep.subr.mxu0 %v188
    %404 = vmatpush2.msra.mxu0 %v187
    %405 = vmatprep.subr.mxu0 %v182
    %406 = vmatpush2.msra.mxu0 %v181
    %407 = vmatprep.subr.mxu0 %v176
    %408 = vmatpush2.msra.mxu0 %v175
    %409 = vmatprep.subr.mxu0 %v170
    %410 = vmatpush2.msra.mxu0 %v169
    %411 = vmatprep.subr.mxu0 %v164
    %412 = vmatpush2.msra.mxu0 %v163
    %413 = vmatprep.subr.mxu0 %v158
    %414 = vmatpush2.msra.mxu0 %v157
    %415 = vmatprep.subr.mxu0 %v152
    %416 = vmatpush2.msra.mxu0 %v151
    %417 = vmatprep.subr.mxu0 %v146
    %418 = vmatpush2.msra.mxu0 %v145
    %419 = vmatprep.subr.mxu0 %v140
    %420 = vmatpush2.msra.mxu0 %v139
    %421 = vmatprep.subr.mxu0 %v134
    %422 = vmatpush2.msra.mxu0 %v133
    %423 = vmatprep.subr.mxu0 %v128
    %424 = vmatpush2.msra.mxu0 %v127
    %425 = vmatprep.mubr.f32.mxu0 %v26
    %426 = vmatmul.mubr.f32.gmra.mxu0 %v25
    %v427 = vpop.f32.mrf.mxu0
    %v428 = vadd.f32 0.0, %v427
    %v429 = vpop.f32.mrf.mxu0
    %v430 = vadd.f32 0.0, %v429
    %431 = vdwg.mxu0
    %432 = vst [vmem:[%s2] sm:$0xff] %v286
    %433 = vst [vmem:[%s2 + $0x8] sm:$0xff] %v288
    %434 = vst [vmem:[%s2 + $0x10] sm:$0xff] %v357
    %435 = vst [vmem:[%s2 + $0x18] sm:$0xff] %v359
    %436 = vst [vmem:[%s2 + $0x20] sm:$0xff] %v428
    %437 = vst [vmem:[%s2 + $0x28] sm:$0xff] %v430
    // Predicated region
    $region14: #{_upsample_jit.1} parent=1 // pred_check
      _
    $region15: #{_upsample_jit.1} parent=1 // pred_check_branch
      %439 = sbr.rel (0) target = $region17
    $region16: #{_upsample_jit.1} parent=1 // pred_region
      _
    $region17: #{_upsample_jit.1} parent=1 // pred_fallthru
      _
    // Predicated region
    $region18: #{_upsample_jit.1} parent=1 // pred_check
      _
    $region19: #{_upsample_jit.1} parent=1 // pred_check_branch
      %441 = sbr.rel (0) target = $region21
    $region20: #{_upsample_jit.1} parent=1 // pred_region
      _
    $region21: #{_upsample_jit.1} parent=1 // pred_fallthru
      _
    %442 = vsyncpa [#allocation3], 1

</llo_original>
